<compile_context>
chip_gen: v5e
topology: v5e:2x2
jax: 0.10.0
libtpu: 0.0.40
codegen_flags: <defaults>
</compile_context>

<pallas_src>
import jax
import jax.numpy as jnp
from jax import lax
from jax.experimental import pallas as pl
from jax.experimental.pallas import tpu as pltpu

MARGIN = 0.4
EPS = 1e-8


def _sim_normalize(v, eps=EPS):
    """Row-wise L2 normalization matching sim_matrix(): v / max(||v||, eps)."""
    v = v.astype(jnp.float32)
    nrm = jnp.sqrt(jnp.sum(v * v, axis=1, keepdims=True))
    return v / jnp.maximum(nrm, eps)


def _loss_kernel(tn_ref, imn_ref, bcol_ref, brow_ref, out_ref, acc_ref):
    """One (i, j) tile of the pairwise max-margin sum.

    tn_ref  : (BN, D)  normalized text rows, block i   (bf16 or f32)
    imn_ref : (BN, D)  normalized image rows, block j  (bf16 or f32)
    bcol_ref: (BN, 1)  f32, bias = w*margin - diag, block i
    brow_ref: (1, BN)  f32, same bias along lanes, block j
    out_ref : (1, 8, 128) f32, per-row-block partial sum (written at last j)
    acc_ref : (BN, 1)  f32 scratch, per-row partial sums carried across j
    """
    i = pl.program_id(0)
    j = pl.program_id(1)
    last_j = pl.num_programs(1) - 1

    @pl.when(j == 0)
    def _init():
        acc_ref[...] = jnp.zeros_like(acc_ref)

    # ONE MXU matmul per tile; the x.T half reuses the same block via the
    # index-swap identity:
    #   sum_{i!=j} relu(w[i]m - d[i] + x[j,i]) = sum_{i!=j} relu(w[j]m - d[j] + x[i,j])
    x_blk = lax.dot_general(tn_ref[...], imn_ref[...],
                            (((1,), (1,)), ((), ())),
                            preferred_element_type=jnp.float32)   # (BN, BN) f32

    b_r = bcol_ref[...]          # (BN, 1) f32
    b_c = brow_ref[...]          # (1, BN) f32

    term1 = jnp.maximum(b_r + x_blk, 0.0)        # x half
    term2 = jnp.maximum(b_c + x_blk, 0.0)        # x.T half (index-swapped)
    # Lane-axis (XLU) row sums only; the cross-sublane reduce to a scalar
    # happens once per row-block in the finalize step.
    acc_ref[...] += (jnp.sum(term1, axis=-1, keepdims=True)
                     + jnp.sum(term2, axis=-1, keepdims=True))

    # fix_norm=True drops the diagonal.  Only the nb diagonal blocks do mask
    # work; the correction re-derives both diagonal terms from the MXU-computed
    # diag(x_blk) so it exactly cancels what was just added (on a diagonal
    # block b_c[r] == b_r[r], hence the factor 2).
    @pl.when(i == j)
    def _drop_diag():
        r = lax.broadcasted_iota(jnp.int32, x_blk.shape, 0)
        c = lax.broadcasted_iota(jnp.int32, x_blk.shape, 1)
        d_mxu = jnp.sum(jnp.where(r == c, x_blk, 0.0), axis=-1, keepdims=True)
        acc_ref[...] -= 2.0 * jnp.maximum(b_r + d_mxu, 0.0)

    @pl.when(j == last_j)
    def _finalize():
        total = jnp.sum(acc_ref[...])
        out_ref[...] = jnp.full(out_ref.shape, total, jnp.float32)


def _choose_blocking(n):
    """Return (block_n, padded_n).  Blocks stay (8,128)-aligned; unaligned N is
    padded with zero rows / zero weights (exactly corrected in the wrapper)."""
    if n <= 512:
        return n, n                       # single full-extent block
    for bn in (512, 256, 128):            # biggest aligned divisor first
        if n % bn == 0:
            return bn, n
    bn = 256
    return bn, -(-n // bn) * bn           # pad up to a multiple of 256


def adaptive_max_margin_ranking_loss(image_embed, text_embed, weight, *,
                                     margin=MARGIN, eps=EPS, block_n=None,
                                     operand_dtype=jnp.bfloat16,
                                     image_buffers=None):
    """image_embed (N,D), text_embed (N,D), weight (N,) -> scalar f32 loss.

    operand_dtype: dtype of the pre-normalized MXU operands streamed through the
      kernel (bf16 default: native MXU rate + half the re-streamed HBM traffic,
      ~1e-3 relative loss error vs an all-f32 computation).
    image_buffers: optional pipeline depth (pl.Buffered) for the j-indexed image
      blocks, e.g. 3 on v5e if profiling shows exposed DMA.
    """
    n, d = text_embed.shape
    assert image_embed.shape == (n, d)
    assert weight.shape == (n,)

    # --- Hoisted precompute (runs ONCE in XLA, not per grid step) -----------
    tn = _sim_normalize(text_embed, eps)                  # (N, D) f32
    imn = _sim_normalize(image_embed, eps)                # (N, D) f32
    diag = jnp.sum(tn * imn, axis=1)                      # (N,)  f32
    bias = weight.astype(jnp.float32) * margin - diag     # (N,)  f32

    if block_n is None:
        bn, n_pad = _choose_blocking(n)
    else:
        bn, n_pad = block_n, -(-n // block_n) * block_n
    pad = n_pad - n
    nb = n_pad // bn

    bias_real = bias
    if pad:
        # Zero rows / zero weights: every (real i, padded j) pair contributes
        # exactly relu(bias[i]) in each half; subtracted analytically below.
        tn = jnp.pad(tn, ((0, pad), (0, 0)))
        imn = jnp.pad(imn, ((0, pad), (0, 0)))
        bias = jnp.pad(bias, (0, pad))

    tn_op = tn.astype(operand_dtype)
    imn_op = imn.astype(operand_dtype)
    b_col = bias.reshape(n_pad, 1)
    b_row = bias.reshape(1, n_pad)

    # VMEM sizing: 2 double-buffered (BN, D) operand blocks + (BN, BN) temps.
    # Keep well under v7x's 64 MiB/TC budget (v5e/v6e have 128 MiB).
    item = jnp.dtype(operand_dtype).itemsize
    est = (2 * 2 * bn * d * item          # double-buffered operand blocks
           + 6 * bn * bn * 4              # x_blk / term temporaries headroom
           + 4 * bn * 4 + 2 * 8 * 128 * 4)
    vmem_limit = int(min(56 * 2 ** 20, max(32 * 2 ** 20, 2 * est)))

    imn_spec_kwargs = {}
    if image_buffers is not None:
        imn_spec_kwargs["pipeline_mode"] = pl.Buffered(image_buffers)

    grid_spec = pltpu.PrefetchScalarGridSpec(
        num_scalar_prefetch=0,
        grid=(nb, nb),
        in_specs=[
            pl.BlockSpec((bn, d), lambda i, j: (i, 0)),                     # text,  block i
            pl.BlockSpec((bn, d), lambda i, j: (j, 0), **imn_spec_kwargs),  # image, block j
            pl.BlockSpec((bn, 1), lambda i, j: (i, 0)),                     # bias col, block i
            pl.BlockSpec((1, bn), lambda i, j: (0, j)),                     # bias row, block j
        ],
        # Per-row-block partial sums: the output block depends only on i, so
        # the i axis is megacore-shardable ("parallel") on v7x.
        out_specs=pl.BlockSpec((1, 8, 128), lambda i, j: (i, 0, 0)),
        scratch_shapes=[pltpu.VMEM((bn, 1), jnp.float32)],
    )

    out = pl.pallas_call(
        _loss_kernel,
        out_shape=jax.ShapeDtypeStruct((nb, 8, 128), jnp.float32),
        grid_spec=grid_spec,
        compiler_params=pltpu.CompilerParams(
            dimension_semantics=("parallel", "arbitrary"),
            vmem_limit_bytes=vmem_limit,
        ),
    )(tn_op, imn_op, b_col, b_row)

    total = jnp.sum(out[:, 0, 0])
    if pad:
        total = total - 2.0 * pad * jnp.sum(jnp.maximum(bias_real, 0.0))
    count = jnp.float32(2 * n * (n - 1))
    return total / count


def _reference(image_embed, text_embed, weight, margin=MARGIN, eps=EPS):
    """Pure-JAX mirror of the PyTorch forward (fix_norm=True path)."""
    a = _sim_normalize(text_embed, eps)
    b = _sim_normalize(image_embed, eps)
    x = jnp.matmul(a, b.T, precision=lax.Precision.HIGHEST)
    n = x.shape[0]
    # diag via row-wise dot: identical in exact arithmetic; avoids depending on
    # the matmul's reduced-precision diagonal.
    diag = jnp.sum(a * b, axis=1)
    x1 = jnp.broadcast_to(diag[:, None], (n, n)).reshape(-1, 1)
    x1 = jnp.concatenate([x1, x1], 0)
    w1 = jnp.broadcast_to(weight[:, None], (n, n)).reshape(-1, 1)
    w1 = jnp.concatenate([w1, w1], 0)
    x2 = jnp.concatenate([x.reshape(-1, 1), x.T.reshape(-1, 1)], 0)
    keep = jnp.ones((n, n)) - jnp.eye(n)
    keep = jnp.concatenate([keep.reshape(-1, 1), keep.T.reshape(-1, 1)], 0).flatten()
    mm = jnp.maximum(w1 * margin - (x1 - x2), 0.0).flatten()
    return jnp.sum(mm * keep) / jnp.sum(keep)


if __name__ == "__main__":
    key = jax.random.PRNGKey(0)
    k1, k2, k3 = jax.random.split(key, 3)

    # Small single-block case (typical per-device batch scale).
    N, D = 8, 32
    image_embed = jax.random.normal(k1, (N, D), dtype=jnp.float32)
    text_embed = jax.random.normal(k2, (N, D), dtype=jnp.float32)
    weight = jax.random.uniform(k3, (N,), dtype=jnp.float32, minval=0.5, maxval=1.5)

    ref = _reference(image_embed, text_embed, weight)

    # Full-precision operand path: tight check against the pure-JAX reference.
    loss_f32 = adaptive_max_margin_ranking_loss(
        image_embed, text_embed, weight, operand_dtype=jnp.float32)
    jax.block_until_ready(loss_f32)
    assert jnp.allclose(loss_f32, ref, atol=1e-4, rtol=1e-4), (loss_f32, ref)

    # Default bf16 MXU operand path (perf path): looser tolerance (~1e-3 rel).
    loss_bf16 = adaptive_max_margin_ranking_loss(image_embed, text_embed, weight)
    jax.block_until_ready(loss_bf16)
    assert jnp.allclose(loss_bf16, ref, atol=1e-2, rtol=1e-2), (loss_bf16, ref)

    # Multi-block grid with padding (N=200 -> 256, block 128): exercises the
    # tiled path, the diagonal-block correction, megacore-parallel partials and
    # the exact pad correction.
    k4, k5, k6 = jax.random.split(jax.random.PRNGKey(1), 3)
    N2, D2 = 200, 128
    image2 = jax.random.normal(k4, (N2, D2), dtype=jnp.float32)
    text2 = jax.random.normal(k5, (N2, D2), dtype=jnp.float32)
    weight2 = jax.random.uniform(k6, (N2,), dtype=jnp.float32, minval=0.5, maxval=1.5)

    ref2 = _reference(image2, text2, weight2)
    loss2_f32 = adaptive_max_margin_ranking_loss(
        image2, text2, weight2, block_n=128, operand_dtype=jnp.float32)
    jax.block_until_ready(loss2_f32)
    assert jnp.allclose(loss2_f32, ref2, atol=2e-4, rtol=2e-4), (loss2_f32, ref2)

    loss2_bf16 = adaptive_max_margin_ranking_loss(image2, text2, weight2, block_n=128)
    jax.block_until_ready(loss2_bf16)
    assert jnp.allclose(loss2_bf16, ref2, atol=1e-2, rtol=1e-2), (loss2_bf16, ref2)

    print("KERNEL_OK")
</pallas_src>

<mosaic_0001>
module attributes {stable_mosaic.version = 11 : i64} {
  func.func @_loss_kernel(%arg0: i32, %arg1: i32, %arg2: memref<8x32xf32, #tpu.memory_space<vmem>>, %arg3: memref<8x32xf32, #tpu.memory_space<vmem>>, %arg4: memref<8x1xf32, #tpu.memory_space<vmem>>, %arg5: memref<1x8xf32, #tpu.memory_space<vmem>>, %arg6: memref<1x8x128xf32, #tpu.memory_space<vmem>>, %arg7: memref<8x1xf32, #tpu.memory_space<vmem>>) attributes {dimension_semantics = [#tpu.dimension_semantics<parallel>, #tpu.dimension_semantics<arbitrary>], iteration_bounds = array<i64: 1, 1>, scalar_prefetch = 0 : i64, scratch_operands = 1 : i64, tpu.core_type = #tpu.core_type<tc>, window_params = [{transform_indices = @transform_0, window_bounds = array<i64: 8, 32>}, {transform_indices = @transform_1, window_bounds = array<i64: 8, 32>}, {transform_indices = @transform_2, window_bounds = array<i64: 8, 1>}, {transform_indices = @transform_3, window_bounds = array<i64: 1, 8>}, {transform_indices = @transform_4, window_bounds = array<i64: 1, 8, 128>}]} {
    %c0_i32 = arith.constant 0 : i32
    %0 = arith.cmpi eq, %arg1, %c0_i32 : i32
    %1 = arith.extui %0 : i1 to i32
    %c0_i32_0 = arith.constant 0 : i32
    %2 = arith.cmpi ne, %1, %c0_i32_0 : i32
    scf.if %2 {
      %cst_19 = arith.constant 0.000000e+00 : f32
      %30 = vector.broadcast %cst_19 : f32 to vector<8x1xf32>
      %c0_20 = arith.constant 0 : index
      %c0_21 = arith.constant 0 : index
      %31 = vector.load %arg7[%c0_20, %c0_21] : memref<8x1xf32, #tpu.memory_space<vmem>>, vector<8x1xf32>
      tpu.vector_store %arg7[%c0_20, %c0_21], %30 {strides = array<i32>} : memref<8x1xf32, #tpu.memory_space<vmem>>, vector<8x1xf32>,
    } else {
    }
    %c0 = arith.constant 0 : index
    %c0_1 = arith.constant 0 : index
    %3 = vector.load %arg2[%c0, %c0_1] : memref<8x32xf32, #tpu.memory_space<vmem>>, vector<8x32xf32>
    %c0_2 = arith.constant 0 : index
    %c0_3 = arith.constant 0 : index
    %4 = vector.load %arg3[%c0_2, %c0_3] : memref<8x32xf32, #tpu.memory_space<vmem>>, vector<8x32xf32>
    %cst = arith.constant dense<0.000000e+00> : vector<8x8xf32>
    %5 = tpu.matmul %3, %4, %cst {dimension_numbers = #tpu.dot_dimension_numbers<[1], [1], [0], [0], [0, 0, 1, 0], [], []>} : vector<8x32xf32>, vector<8x32xf32>, vector<8x8xf32> -> vector<8x8xf32>
    %c0_4 = arith.constant 0 : index
    %c0_5 = arith.constant 0 : index
    %6 = vector.load %arg4[%c0_4, %c0_5] : memref<8x1xf32, #tpu.memory_space<vmem>>, vector<8x1xf32>
    %c0_6 = arith.constant 0 : index
    %c0_7 = arith.constant 0 : index
    %7 = vector.load %arg5[%c0_6, %c0_7] : memref<1x8xf32, #tpu.memory_space<vmem>>, vector<1x8xf32>
    %8 = vector.broadcast %6 : vector<8x1xf32> to vector<8x8xf32>
    %9 = arith.addf %8, %5 : vector<8x8xf32>
    %cst_8 = arith.constant 0.000000e+00 : f32
    %10 = vector.broadcast %cst_8 : f32 to vector<8x8xf32>
    %11 = arith.maximumf %9, %10 : vector<8x8xf32>
    %12 = vector.broadcast %7 : vector<1x8xf32> to vector<8x8xf32>
    %13 = arith.addf %12, %5 : vector<8x8xf32>
    %cst_9 = arith.constant 0.000000e+00 : f32
    %14 = vector.broadcast %cst_9 : f32 to vector<8x8xf32>
    %15 = arith.maximumf %13, %14 : vector<8x8xf32>
    %c0_10 = arith.constant 0 : index
    %c0_11 = arith.constant 0 : index
    %16 = vector.load %arg7[%c0_10, %c0_11] : memref<8x1xf32, #tpu.memory_space<vmem>>, vector<8x1xf32>
    %cst_12 = arith.constant dense<0.000000e+00> : vector<8xf32>
    %17 = vector.multi_reduction <add>, %11, %cst_12 [1] : vector<8x8xf32> to vector<8xf32>
    %18 = vector.shape_cast %17 : vector<8xf32> to vector<8x1xf32>
    %cst_13 = arith.constant dense<0.000000e+00> : vector<8xf32>
    %19 = vector.multi_reduction <add>, %15, %cst_13 [1] : vector<8x8xf32> to vector<8xf32>
    %20 = vector.shape_cast %19 : vector<8xf32> to vector<8x1xf32>
    %21 = arith.addf %18, %20 : vector<8x1xf32>
    %22 = arith.addf %16, %21 : vector<8x1xf32>
    %c0_14 = arith.constant 0 : index
    %c0_15 = arith.constant 0 : index
    %23 = vector.load %arg7[%c0_14, %c0_15] : memref<8x1xf32, #tpu.memory_space<vmem>>, vector<8x1xf32>
    tpu.vector_store %arg7[%c0_14, %c0_15], %22 {strides = array<i32>} : memref<8x1xf32, #tpu.memory_space<vmem>>, vector<8x1xf32>,
    %24 = arith.cmpi eq, %arg0, %arg1 : i32
    %25 = arith.extui %24 : i1 to i32
    %c0_i32_16 = arith.constant 0 : i32
    %26 = arith.cmpi ne, %25, %c0_i32_16 : i32
    scf.if %26 {
      %30 = tpu.iota {dimensions = array<i32: 0>} : vector<8x8xi32>
      %31 = tpu.iota {dimensions = array<i32: 1>} : vector<8x8xi32>
      %32 = arith.cmpi eq, %30, %31 : vector<8x8xi32>
      %cst_19 = arith.constant 0.000000e+00 : f32
      %33 = vector.broadcast %cst_19 : f32 to vector<8x8xf32>
      %34 = arith.select %32, %5, %33 : vector<8x8xi1>, vector<8x8xf32>
      %cst_20 = arith.constant dense<0.000000e+00> : vector<8xf32>
      %35 = vector.multi_reduction <add>, %34, %cst_20 [1] : vector<8x8xf32> to vector<8xf32>
      %36 = vector.shape_cast %35 : vector<8xf32> to vector<8x1xf32>
      %c0_21 = arith.constant 0 : index
      %c0_22 = arith.constant 0 : index
      %37 = vector.load %arg7[%c0_21, %c0_22] : memref<8x1xf32, #tpu.memory_space<vmem>>, vector<8x1xf32>
      %38 = arith.addf %6, %36 : vector<8x1xf32>
      %cst_23 = arith.constant 0.000000e+00 : f32
      %39 = vector.broadcast %cst_23 : f32 to vector<8x1xf32>
      %40 = arith.maximumf %38, %39 : vector<8x1xf32>
      %cst_24 = arith.constant 2.000000e+00 : f32
      %41 = vector.broadcast %cst_24 : f32 to vector<8x1xf32>
      %42 = arith.mulf %41, %40 : vector<8x1xf32>
      %43 = arith.subf %37, %42 : vector<8x1xf32>
      %c0_25 = arith.constant 0 : index
      %c0_26 = arith.constant 0 : index
      %44 = vector.load %arg7[%c0_25, %c0_26] : memref<8x1xf32, #tpu.memory_space<vmem>>, vector<8x1xf32>
      tpu.vector_store %arg7[%c0_25, %c0_26], %43 {strides = array<i32>} : memref<8x1xf32, #tpu.memory_space<vmem>>, vector<8x1xf32>,
    } else {
    }
    %c0_i32_17 = arith.constant 0 : i32
    %27 = arith.cmpi eq, %arg1, %c0_i32_17 : i32
    %28 = arith.extui %27 : i1 to i32
    %c0_i32_18 = arith.constant 0 : i32
    %29 = arith.cmpi ne, %28, %c0_i32_18 : i32
    scf.if %29 {
      %c0_19 = arith.constant 0 : index
      %c0_20 = arith.constant 0 : index
      %30 = vector.load %arg7[%c0_19, %c0_20] : memref<8x1xf32, #tpu.memory_space<vmem>>, vector<8x1xf32>
      %31 = vector.shape_cast %30 : vector<8x1xf32> to vector<1x8x1xf32>
      %cst_21 = arith.constant dense<0.000000e+00> : vector<1xf32>
      %32 = vector.multi_reduction <add>, %31, %cst_21 [1, 2] : vector<1x8x1xf32> to vector<1xf32>
      %33 = vector.shape_cast %32 : vector<1xf32> to vector<1x1x1xf32>
      %34 = vector.extract %33[0, 0, 0] : f32 from vector<1x1x1xf32>
      %35 = vector.broadcast %34 : f32 to vector<1x8x128xf32>
      %c0_22 = arith.constant 0 : index
      %c0_23 = arith.constant 0 : index
      %c0_24 = arith.constant 0 : index
      %36 = vector.load %arg6[%c0_22, %c0_23, %c0_24] : memref<1x8x128xf32, #tpu.memory_space<vmem>>, vector<1x8x128xf32>
      tpu.vector_store %arg6[%c0_22, %c0_23, %c0_24], %35 {strides = array<i32>} : memref<1x8x128xf32, #tpu.memory_space<vmem>>, vector<1x8x128xf32>,
    } else {
    }
    return
  }
  func.func @transform_0(%arg0: i32, %arg1: i32) -> (i32, i32) {
    %c0_i32 = arith.constant 0 : i32
    %c0_i32_0 = arith.constant 0 : i32
    return %arg0, %c0_i32 : i32, i32
  }
  func.func @transform_1(%arg0: i32, %arg1: i32) -> (i32, i32) {
    %c0_i32 = arith.constant 0 : i32
    %c0_i32_0 = arith.constant 0 : i32
    return %arg1, %c0_i32 : i32, i32
  }
  func.func @transform_2(%arg0: i32, %arg1: i32) -> (i32, i32) {
    %c0_i32 = arith.constant 0 : i32
    %c0_i32_0 = arith.constant 0 : i32
    return %arg0, %c0_i32 : i32, i32
  }
  func.func @transform_3(%arg0: i32, %arg1: i32) -> (i32, i32) {
    %c0_i32 = arith.constant 0 : i32
    %c0_i32_0 = arith.constant 0 : i32
    return %c0_i32, %arg1 : i32, i32
  }
  func.func @transform_4(%arg0: i32, %arg1: i32) -> (i32, i32, i32) {
    %c0_i32 = arith.constant 0 : i32
    %c0_i32_0 = arith.constant 0 : i32
    %c0_i32_1 = arith.constant 0 : i32
    return %arg0, %c0_i32, %c0_i32_0 : i32, i32, i32
  }
}

</mosaic_0001>

<llo_original>
// kernel: tpu_custom_call.1
$region0: #{tpu_custom_call.1}
  #allocation0 [shape = 'u32[]', space=smem, size = 0x4, offset = 0x4, fixed_abs, tag = 'smem constant byte address 0x4 - core index']
  #allocation1 [shape = 'u32[72,128]{1,0:T(1,128)}', space=vmem, size = 0x9000, scoped, tag = 'internal scratch']
  #allocation2 [shape = 'f32[8,1]{1,0:T(8,128)}', space=vmem, size = 0x1000, scoped, tag = 'scratch operand']
  %s0 = inlined_call_operand.vmem [shape: f32[8,32], index: 0, kind: input, shape index: {}]
  %s1 = inlined_call_operand.hbm [shape: f32[8,32], index: 1, kind: input, shape index: {}]
  %s2 = inlined_call_operand.vmem [shape: f32[8,1], index: 2, kind: input, shape index: {}]
  %s3 = inlined_call_operand.vmem [shape: f32[1,8], index: 3, kind: input, shape index: {}]
  %s4 = inlined_call_operand.hbm [shape: f32[1,8,128], index: 4, kind: output, shape index: {}]
  %s5 = sld [smem:[#allocation0]]
  $region42: #{tpu_custom_call.1} parent=0
    _
  %s7 = ssub.s32 1, %s5
  %s8 = scalar_select 0, %s7, %s5
  $region1: #{tpu_custom_call.1} parent=0
    #allocation3 [shape = 'u8[4096]{0}', space=vmem, size = 0x1000, scoped, tag = 'input window, operand 1, single buffered']
    #allocation4 [shape = 's32[1]{0}', space=sflag, size = 0x4, scoped, tag = 'scoped memory for tpu_custom_call.1']
    #allocation5 [shape = 's32[1]{0}', space=sflag, size = 0x4, scoped, tag = 'scoped memory for tpu_custom_call.1']
    #allocation6 [shape = 'u8[4096]{0}', space=vmem, size = 0x1000, scoped, tag = 'output window, operand 0, single buffered']
    %9 = vsyncpa [#allocation4], 0
    %10 = vsyncpa [#allocation5], 0
    // Predicated region
    $region2: #{tpu_custom_call.1} parent=1 // pred_check
      _
    $region3: #{tpu_custom_call.1} parent=1 // pred_check_branch
      %12 = sbr.rel (0) target = $region5
    $region4: #{tpu_custom_call.1} parent=1 // pred_region
      _
    $region5: #{tpu_custom_call.1} parent=1 // pred_fallthru
      _
    // Predicated region
    $region6: #{tpu_custom_call.1} parent=1 // pred_check
      _
    $region7: #{tpu_custom_call.1} parent=1 // pred_check_branch
      %14 = sbr.rel (0) target = $region9
    $region8: #{tpu_custom_call.1} parent=1 // pred_region
      %16 = vsyncadd [#allocation4], 0
      %s18 = sshll.u32 %s1, 4
      %s19 = int_to_ptr.hbm [resolvable:$true] %s18
      %s20 = sshll.u32 [#allocation3], 4
      %s21 = int_to_ptr.vmem [resolvable:$true] %s20
      %23 = dma.hbm_to_vmem [thread:$0]  %s19, 128, %s21, [#allocation4]
    $region9: #{tpu_custom_call.1} parent=1 // pred_fallthru
      _
    // Predicated region
    $region10: #{tpu_custom_call.1} parent=1 // pred_check
      _
    $region11: #{tpu_custom_call.1} parent=1 // pred_check_branch
      %25 = sbr.rel (0) target = $region13
    $region12: #{tpu_custom_call.1} parent=1 // pred_region
      _
    $region13: #{tpu_custom_call.1} parent=1 // pred_fallthru
      _
    // Predicated region
    $region14: #{tpu_custom_call.1} parent=1 // pred_check
      _
    $region15: #{tpu_custom_call.1} parent=1 // pred_check_branch
      %27 = sbr.rel (0) target = $region17
    $region16: #{tpu_custom_call.1} parent=1 // pred_region
      _
    $region17: #{tpu_custom_call.1} parent=1 // pred_fallthru
      _
    // Predicated region
    $region18: #{tpu_custom_call.1} parent=1 // pred_check
      _
    $region19: #{tpu_custom_call.1} parent=1 // pred_check_branch
      %29 = sbr.rel (0) target = $region21
    $region20: #{tpu_custom_call.1} parent=1 // pred_region
      %31 = dma.done [#allocation4], 128
    $region21: #{tpu_custom_call.1} parent=1 // pred_fallthru
      _
    %p32 = scmp.eq.s32.totalorder 0, 0
    // Predicated region
    $region22: #{tpu_custom_call.1} parent=1 // pred_check
      %p33 = pneg %p32
    $region23: #{tpu_custom_call.1} parent=1 // pred_check_branch
      %35 = sbr.rel (%p33) target = $region25
    $region24: #{tpu_custom_call.1} parent=1 // pred_region
      %vm36 = vcmask 7168
      %37 = vst.msk [vmem:[#allocation2] sm:$0xff] %vm36, 0.0
    $region25: #{tpu_custom_call.1} parent=1 // pred_fallthru
      _
    %v38 = vld [vmem:[%s0] sm:$0xff]
    %v39 = vld [vmem:[#allocation3] sm:$0xff]
    %vm40 = vcmask 261120
    %v42 = vsel %vm40, %v38, 0
    %v45 = vsel %vm40, %v39, 0
    %47 = vmatpush.xpose.msra.mxu0 0.0
    %48 = vmatpush.xpose.msra.mxu0 0.0
    %49 = vmatpush.xpose.msra.mxu0 0.0
    %50 = vmatpush.xpose.msra.mxu0 0.0
    %51 = vmatpush.xpose.msra.mxu0 0.0
    %52 = vmatpush.xpose.msra.mxu0 0.0
    %53 = vmatpush.xpose.msra.mxu0 0.0
    %54 = vmatpush.xpose.msra.mxu0 0.0
    %55 = vmatpush.xpose.msra.mxu0 0.0
    %56 = vmatpush.xpose.msra.mxu0 0.0
    %57 = vmatpush.xpose.msra.mxu0 0.0
    %58 = vmatpush.xpose.msra.mxu0 0.0
    %59 = vmatpush.xpose.msra.mxu0 0.0
    %60 = vmatpush.xpose.msra.mxu0 0.0
    %61 = vmatpush.xpose.msra.mxu0 0.0
    %62 = vmatpush.xpose.msra.mxu0 %v45
    %63 = vmatmul.f32.gmra.mxu0 %v42
    %v64 = vpop.f32.mrf.mxu0
    %v65 = vadd.f32 0.0, %v64
    %66 = vdwg.mxu0
    %v67 = vld [vmem:[%s2] sm:$0xff]
    %v68 = vld [vmem:[%s3] sm:$0x1]
    %70 = vset.pattern.permute.xlu0 0
    %71 = vperm.xlu0 %70, %v67
    %v72 = vpop.permute.xlu0 %71
    %v74 = vadd.f32 %v72, %v65
    %v75 = vmax.f32 %v74, 0.0
    %v77 = vperm.slane %v68, 0
    %v79 = vadd.f32 %v77, %v65
    %v80 = vmax.f32 %v79, 0.0
    %v81 = vld [vmem:[#allocation2] sm:$0xff]
    %vm82 = vcmask 64512
    %v83 = vsel %vm82, %v75, 0.0
    %84 = vadd.xlane.f32.xlu0 %v83
    %v85 = vpop.xlane.xlu0 %84
    %v86 = vsel %vm82, %v80, 0.0
    %87 = vadd.xlane.f32.xlu0 %v86
    %v88 = vpop.xlane.xlu0 %87
    %v89 = vadd.f32 %v85, %v88
    %v90 = vadd.f32 %v81, %v89
    %vm91 = vcmask 7168
    %92 = vst.msk [vmem:[#allocation2] sm:$0xff] %vm91, %v90
    %p93 = scmp.eq.s32.totalorder 0, 0
    // Predicated region
    $region26: #{tpu_custom_call.1} parent=1 // pred_check
      %p94 = pneg %p93
    $region27: #{tpu_custom_call.1} parent=1 // pred_check_branch
      %96 = sbr.rel (%p94) target = $region29
    $region28: #{tpu_custom_call.1} parent=1 // pred_region
      %v97 = vlaneseq
      %v98 = vshrl.u32 %v97, 7
      %v99 = vlaneseq
      %v100 = vand.u32 %v99, 127
      %vm101 = vcmp.eq.s32.totalorder %v98, %v100
      %v102 = vsel %vm101, %v65, 0.0
      %v103 = vsel %vm82, %v102, 0.0
      %104 = vadd.xlane.f32.xlu0 %v103
      %v105 = vpop.xlane.xlu0 %104
      %v106 = vld [vmem:[#allocation2] sm:$0xff]
      %v107 = vadd.f32 %v67, %v105
      %v108 = vmax.f32 %v107, 0.0
      %v109 = vmul.f32 %v108, 2.0
      %v110 = vsub.f32 %v106, %v109
      %111 = vst.msk [vmem:[#allocation2] sm:$0xff] %vm91, %v110
    $region29: #{tpu_custom_call.1} parent=1 // pred_fallthru
      _
    // Predicated region
    $region30: #{tpu_custom_call.1} parent=1 // pred_check
      %p112 = pneg %p32
    $region31: #{tpu_custom_call.1} parent=1 // pred_check_branch
      %114 = sbr.rel (%p112) target = $region33
    $region32: #{tpu_custom_call.1} parent=1 // pred_region
      %v115 = vld [vmem:[#allocation2] sm:$0xff]
      %v116 = vsel %vm91, %v115, 0.0
      %117 = vadd.xlane.f32.xlu0 %v116
      %v118 = vpop.xlane.xlu0 %117
      %v119 = vrot.slane %v118, 4
      %v120 = vadd.f32 %v118, %v119
      %v121 = vrot.slane %v120, 2
      %v122 = vadd.f32 %v120, %v121
      %v123 = vrot.slane %v122, 1
      %v124 = vadd.f32 %v122, %v123
      %s125 = vtos %v124
      %v126 = vstv %s125
      %127 = vst [vmem:[#allocation6] sm:$0xff] %v126
    $region33: #{tpu_custom_call.1} parent=1 // pred_fallthru
      _
    // Predicated region
    $region34: #{tpu_custom_call.1} parent=1 // pred_check
      _
    $region35: #{tpu_custom_call.1} parent=1 // pred_check_branch
      %129 = sbr.rel (0) target = $region37
    $region36: #{tpu_custom_call.1} parent=1 // pred_region
      %131 = vsyncadd [#allocation5], 0
      %s133 = sshll.u32 [#allocation6], 4
      %s134 = int_to_ptr.vmem [resolvable:$true] %s133
      %s135 = sshll.u32 %s4, 4
      %s136 = int_to_ptr.hbm [resolvable:$true] %s135
      %138 = dma.vmem_to_hbm [thread:$0]  %s134, 128, %s136, [#allocation5]
    $region37: #{tpu_custom_call.1} parent=1 // pred_fallthru
      _
    // Predicated region
    $region38: #{tpu_custom_call.1} parent=1 // pred_check
      _
    $region39: #{tpu_custom_call.1} parent=1 // pred_check_branch
      %140 = sbr.rel (0) target = $region41
    $region40: #{tpu_custom_call.1} parent=1 // pred_region
      %142 = dma.done [#allocation5], 128
    $region41: #{tpu_custom_call.1} parent=1 // pred_fallthru
      _
    %143 = vsyncpa [#allocation4], 1
    %144 = vsyncpa [#allocation5], 1

</llo_original>
